<compile_context>
chip_gen: v7x
topology: tpu7x:2x2x1
jax: 0.10.0
libtpu: 0.0.40
codegen_flags: <defaults>
</compile_context>

<pallas_src>
import functools

import jax
import jax.numpy as jnp
from jax import lax
from jax.experimental import pallas as pl
from jax.experimental.pallas import tpu as pltpu

INPUT_SIZE = 64
HIDDEN_SIZE = 128

_MAX_T_CHUNK = 64                        # max unrolled timesteps per grid step
_MAX_B_TILE = 256                        # batch rows per block (MXU row granularity)
_VMEM_LIMIT_BYTES = 32 * 1024 * 1024     # explicit scoped-VMEM limit (safe on v5e/v6e/v7x)


def _rnn_chunk_kernel(xp_ref, whh_ref, h_ref, *, t_chunk, precision):
    """One grid step == `t_chunk` RNN timesteps for one batch tile.

    xp_ref : (t_chunk, b_tile, H)  precomputed x_t @ W_ih^T + (b_ih + b_hh)
    whh_ref: (H, H)                W_hh^T (f32 or bf16), loop-invariant
    h_ref  : (b_tile, H) f32       hidden state; VMEM-resident output block
                                   (its index_map is constant over the time axis)
    """
    t = pl.program_id(1)

    @pl.when(t == 0)
    def _():
        h_ref[...] = jnp.zeros_like(h_ref)   # h_0 = 0 for this batch tile

    whh = whh_ref[...]                        # hoisted; weight-stationary RHS on the MXU

    def step(i, h):
        # Only the h-dependent matmul + tanh sit on the serial critical path;
        # padded leading timesteps have xp == 0, so tanh(0 + 0 @ W_hh) == 0
        # keeps h at h_0 without any mask/select.
        pre = xp_ref[i].astype(jnp.float32) + jnp.dot(
            h.astype(whh.dtype), whh,
            preferred_element_type=jnp.float32, precision=precision)
        return jnp.tanh(pre)

    h_ref[...] = lax.fori_loop(0, t_chunk, step, h_ref[...], unroll=True)


def _choose_tiles(batch, seq_len, xp_itemsize, sublane):
    """Pick (b_pad, b_tile, t_chunk) so the double-buffered xp block stays
    well under the scoped-VMEM limit on all generations."""
    b_pad = -(-batch // sublane) * sublane
    if b_pad > _MAX_B_TILE:
        b_tile = _MAX_B_TILE
        b_pad = -(-b_pad // b_tile) * b_tile
    else:
        b_tile = b_pad
    budget = _VMEM_LIMIT_BYTES // 2                    # headroom for W_hh, out block, regs
    per_step_bytes = b_tile * HIDDEN_SIZE * xp_itemsize
    t_cap = max(1, budget // (2 * per_step_bytes))     # 2 = input double-buffering
    t_chunk = int(min(_MAX_T_CHUNK, t_cap, max(seq_len, 1)))
    return b_pad, b_tile, t_chunk


def rnn_forward(x, w_ih, w_hh, b_ih, b_hh, *,
                matmul_dtype=jnp.bfloat16, precision=None):
    """x: (seq, batch, 64) -> hidden: (1, batch, 128)  (== torch `hidden` output).

    matmul_dtype : dtype of the W_hh matmul operands and the streamed xp
                   (accumulation, add and tanh stay f32).  bfloat16 (default)
                   cuts MXU passes and halves xp DMA; use jnp.float32
                   (optionally with precision=lax.Precision.HIGHEST) for the
                   tightest torch-f32 parity.
    """
    seq_len, batch, in_sz = x.shape
    assert in_sz == INPUT_SIZE

    if seq_len == 0:
        # torch.nn.RNN returns h_0 (zeros) for an empty sequence.
        return jnp.zeros((1, batch, HIDDEN_SIZE), jnp.float32)

    x = jnp.asarray(x, jnp.float32)
    w_ih = jnp.asarray(w_ih, jnp.float32)
    w_hh = jnp.asarray(w_hh, jnp.float32)
    bias = jnp.asarray(b_ih, jnp.float32) + jnp.asarray(b_hh, jnp.float32)

    xp_dtype = jnp.dtype(matmul_dtype)
    sublane = 8 if xp_dtype.itemsize >= 4 else 16      # f32 vs bf16 sublane tile
    b_pad, b_tile, t_chunk = _choose_tiles(batch, seq_len, xp_dtype.itemsize, sublane)

    # Hoisted input projection: one well-shaped (seq*B, 64) @ (64, 128) matmul.
    # TODO(synk): for long seq / large batch, stream x and fuse this projection
    # into the kernel prologue to avoid the xp HBM round-trip.
    xp = (jnp.einsum("tbi,hi->tbh", x, w_ih,
                     preferred_element_type=jnp.float32,
                     precision=precision) + bias).astype(xp_dtype)

    # Zero LEFT-pad time (exact: keeps h at 0), right-pad batch to the tile.
    seq_pad = -(-seq_len // t_chunk) * t_chunk
    xp = jnp.pad(xp, ((seq_pad - seq_len, 0), (0, b_pad - batch), (0, 0)))

    whh_t = w_hh.T.astype(matmul_dtype)                # kernel computes h @ W_hh^T

    kernel = functools.partial(_rnn_chunk_kernel, t_chunk=t_chunk,
                               precision=precision)

    h_final = pl.pallas_call(
        kernel,
        out_shape=jax.ShapeDtypeStruct((b_pad, HIDDEN_SIZE), jnp.float32),
        grid_spec=pltpu.PrefetchScalarGridSpec(
            num_scalar_prefetch=0,
            grid=(b_pad // b_tile, seq_pad // t_chunk),
            in_specs=[
                pl.BlockSpec((t_chunk, b_tile, HIDDEN_SIZE),
                             lambda bi, ti: (ti, bi, 0)),
                pl.BlockSpec((HIDDEN_SIZE, HIDDEN_SIZE),
                             lambda bi, ti: (0, 0)),
            ],
            out_specs=pl.BlockSpec((b_tile, HIDDEN_SIZE),
                                   lambda bi, ti: (bi, 0)),
        ),
        compiler_params=pltpu.CompilerParams(
            # batch tiles are independent (megacore on v7x); time is serial.
            dimension_semantics=("parallel", "arbitrary"),
            vmem_limit_bytes=_VMEM_LIMIT_BYTES,
        ),
    )(xp, whh_t)

    return h_final[:batch][None]                       # (1, batch, HIDDEN_SIZE)


def rnn_reference(x, w_ih, w_hh, b_ih, b_hh):
    """Pure-JAX reference mirroring torch.nn.RNN (tanh, single layer, h_0 = 0)."""
    def step(h, x_t):
        h_new = jnp.tanh(x_t @ w_ih.T + b_ih + h @ w_hh.T + b_hh)
        return h_new, None

    h0 = jnp.zeros((x.shape[1], HIDDEN_SIZE), jnp.float32)
    h_final, _ = lax.scan(step, h0, x.astype(jnp.float32))
    return h_final[None]                               # (1, B, H)


if __name__ == "__main__":
    seq_len, batch = 8, 2

    key = jax.random.PRNGKey(0)
    kx, k1, k2, k3, k4 = jax.random.split(key, 5)

    # Same uniform init range as torch.nn.RNN defaults.
    bound = 1.0 / jnp.sqrt(jnp.float32(HIDDEN_SIZE))
    w_ih = jax.random.uniform(k1, (HIDDEN_SIZE, INPUT_SIZE), jnp.float32, -bound, bound)
    w_hh = jax.random.uniform(k2, (HIDDEN_SIZE, HIDDEN_SIZE), jnp.float32, -bound, bound)
    b_ih = jax.random.uniform(k3, (HIDDEN_SIZE,), jnp.float32, -bound, bound)
    b_hh = jax.random.uniform(k4, (HIDDEN_SIZE,), jnp.float32, -bound, bound)

    x = jax.random.normal(kx, (seq_len, batch, INPUT_SIZE), jnp.float32)

    ref = rnn_reference(x, w_ih, w_hh, b_ih, b_hh)

    # Default fast path: bf16 W_hh / xp operands, f32 accumulate + tanh.
    hidden = jax.block_until_ready(rnn_forward(x, w_ih, w_hh, b_ih, b_hh))
    assert hidden.shape == (1, batch, HIDDEN_SIZE)
    assert jnp.allclose(hidden, ref, atol=2e-2, rtol=2e-2), "bf16 path mismatch vs reference"

    # Full-f32 path (closer torch.nn.RNN parity; tolerance covers MXU default
    # precision on both the kernel and the XLA reference).
    hidden_f32 = jax.block_until_ready(
        rnn_forward(x, w_ih, w_hh, b_ih, b_hh, matmul_dtype=jnp.float32))
    assert hidden_f32.shape == (1, batch, HIDDEN_SIZE)
    assert jnp.allclose(hidden_f32, ref, atol=2e-2, rtol=2e-2), "f32 path mismatch vs reference"

    print("KERNEL_OK")
</pallas_src>

<mosaic_0001>
module attributes {stable_mosaic.version = 11 : i64} {
  func.func @_rnn_chunk_kernel(%arg0: i32, %arg1: i32, %arg2: memref<8x16x128xbf16, #tpu.memory_space<vmem>>, %arg3: memref<128x128xbf16, #tpu.memory_space<vmem>>, %arg4: memref<16x128xf32, #tpu.memory_space<vmem>>) attributes {dimension_semantics = [#tpu.dimension_semantics<parallel>, #tpu.dimension_semantics<arbitrary>], iteration_bounds = array<i64: 1, 1>, scalar_prefetch = 0 : i64, scratch_operands = 0 : i64, tpu.core_type = #tpu.core_type<tc>, window_params = [{transform_indices = @transform_0, window_bounds = array<i64: 8, 16, 128>}, {pipeline_mode = #tpu.pipeline_mode<synchronous>, transform_indices = @transform_1, window_bounds = array<i64: 128, 128>}, {transform_indices = @transform_2, window_bounds = array<i64: 16, 128>}]} {
    %c0_i32 = arith.constant 0 : i32
    %0 = arith.cmpi eq, %arg1, %c0_i32 : i32
    %1 = arith.extui %0 : i1 to i32
    %c0_i32_0 = arith.constant 0 : i32
    %2 = arith.cmpi ne, %1, %c0_i32_0 : i32
    scf.if %2 {
      %cst_30 = arith.constant 0.000000e+00 : f32
      %70 = vector.broadcast %cst_30 : f32 to vector<16x128xf32>
      %c0_31 = arith.constant 0 : index
      %c0_32 = arith.constant 0 : index
      %71 = vector.load %arg4[%c0_31, %c0_32] : memref<16x128xf32, #tpu.memory_space<vmem>>, vector<16x128xf32>
      tpu.vector_store %arg4[%c0_31, %c0_32], %70 {strides = array<i32>} : memref<16x128xf32, #tpu.memory_space<vmem>>, vector<16x128xf32>,
    } else {
    }
    %c0 = arith.constant 0 : index
    %c0_1 = arith.constant 0 : index
    %3 = vector.load %arg3[%c0, %c0_1] : memref<128x128xbf16, #tpu.memory_space<vmem>>, vector<128x128xbf16>
    %c0_2 = arith.constant 0 : index
    %c0_3 = arith.constant 0 : index
    %4 = vector.load %arg4[%c0_2, %c0_3] : memref<16x128xf32, #tpu.memory_space<vmem>>, vector<16x128xf32>
    %c0_i32_4 = arith.constant 0 : i32
    %5 = arith.index_cast %c0_i32_4 : i32 to index
    %c0_5 = arith.constant 0 : index
    %c0_6 = arith.constant 0 : index
    %6 = vector.load %arg2[%5, %c0_5, %c0_6] : memref<8x16x128xbf16, #tpu.memory_space<vmem>>, vector<1x16x128xbf16>
    %7 = vector.shape_cast %6 : vector<1x16x128xbf16> to vector<16x128xbf16>
    %8 = arith.extf %7 : vector<16x128xbf16> to vector<16x128xf32>
    %9 = arith.truncf %4 : vector<16x128xf32> to vector<16x128xbf16>
    %cst = arith.constant dense<0.000000e+00> : vector<16x128xf32>
    %10 = tpu.matmul %9, %3, %cst {dimension_numbers = #tpu.dot_dimension_numbers<[1], [0], [0], [1], [0, 0, 1, 1], [], []>} : vector<16x128xbf16>, vector<128x128xbf16>, vector<16x128xf32> -> vector<16x128xf32>
    %11 = arith.addf %8, %10 : vector<16x128xf32>
    %12 = math.tanh %11 : vector<16x128xf32>
    %c1_i32 = arith.constant 1 : i32
    %13 = arith.index_cast %c1_i32 : i32 to index
    %c0_7 = arith.constant 0 : index
    %c0_8 = arith.constant 0 : index
    %14 = vector.load %arg2[%13, %c0_7, %c0_8] : memref<8x16x128xbf16, #tpu.memory_space<vmem>>, vector<1x16x128xbf16>
    %15 = vector.shape_cast %14 : vector<1x16x128xbf16> to vector<16x128xbf16>
    %16 = arith.extf %15 : vector<16x128xbf16> to vector<16x128xf32>
    %17 = arith.truncf %12 : vector<16x128xf32> to vector<16x128xbf16>
    %cst_9 = arith.constant dense<0.000000e+00> : vector<16x128xf32>
    %18 = tpu.matmul %17, %3, %cst_9 {dimension_numbers = #tpu.dot_dimension_numbers<[1], [0], [0], [1], [0, 0, 1, 1], [], []>} : vector<16x128xbf16>, vector<128x128xbf16>, vector<16x128xf32> -> vector<16x128xf32>
    %19 = arith.addf %16, %18 : vector<16x128xf32>
    %20 = math.tanh %19 : vector<16x128xf32>
    %c2_i32 = arith.constant 2 : i32
    %21 = arith.index_cast %c2_i32 : i32 to index
    %c0_10 = arith.constant 0 : index
    %c0_11 = arith.constant 0 : index
    %22 = vector.load %arg2[%21, %c0_10, %c0_11] : memref<8x16x128xbf16, #tpu.memory_space<vmem>>, vector<1x16x128xbf16>
    %23 = vector.shape_cast %22 : vector<1x16x128xbf16> to vector<16x128xbf16>
    %24 = arith.extf %23 : vector<16x128xbf16> to vector<16x128xf32>
    %25 = arith.truncf %20 : vector<16x128xf32> to vector<16x128xbf16>
    %cst_12 = arith.constant dense<0.000000e+00> : vector<16x128xf32>
    %26 = tpu.matmul %25, %3, %cst_12 {dimension_numbers = #tpu.dot_dimension_numbers<[1], [0], [0], [1], [0, 0, 1, 1], [], []>} : vector<16x128xbf16>, vector<128x128xbf16>, vector<16x128xf32> -> vector<16x128xf32>
    %27 = arith.addf %24, %26 : vector<16x128xf32>
    %28 = math.tanh %27 : vector<16x128xf32>
    %c3_i32 = arith.constant 3 : i32
    %29 = arith.index_cast %c3_i32 : i32 to index
    %c0_13 = arith.constant 0 : index
    %c0_14 = arith.constant 0 : index
    %30 = vector.load %arg2[%29, %c0_13, %c0_14] : memref<8x16x128xbf16, #tpu.memory_space<vmem>>, vector<1x16x128xbf16>
    %31 = vector.shape_cast %30 : vector<1x16x128xbf16> to vector<16x128xbf16>
    %32 = arith.extf %31 : vector<16x128xbf16> to vector<16x128xf32>
    %33 = arith.truncf %28 : vector<16x128xf32> to vector<16x128xbf16>
    %cst_15 = arith.constant dense<0.000000e+00> : vector<16x128xf32>
    %34 = tpu.matmul %33, %3, %cst_15 {dimension_numbers = #tpu.dot_dimension_numbers<[1], [0], [0], [1], [0, 0, 1, 1], [], []>} : vector<16x128xbf16>, vector<128x128xbf16>, vector<16x128xf32> -> vector<16x128xf32>
    %35 = arith.addf %32, %34 : vector<16x128xf32>
    %36 = math.tanh %35 : vector<16x128xf32>
    %c4_i32 = arith.constant 4 : i32
    %37 = arith.index_cast %c4_i32 : i32 to index
    %c0_16 = arith.constant 0 : index
    %c0_17 = arith.constant 0 : index
    %38 = vector.load %arg2[%37, %c0_16, %c0_17] : memref<8x16x128xbf16, #tpu.memory_space<vmem>>, vector<1x16x128xbf16>
    %39 = vector.shape_cast %38 : vector<1x16x128xbf16> to vector<16x128xbf16>
    %40 = arith.extf %39 : vector<16x128xbf16> to vector<16x128xf32>
    %41 = arith.truncf %36 : vector<16x128xf32> to vector<16x128xbf16>
    %cst_18 = arith.constant dense<0.000000e+00> : vector<16x128xf32>
    %42 = tpu.matmul %41, %3, %cst_18 {dimension_numbers = #tpu.dot_dimension_numbers<[1], [0], [0], [1], [0, 0, 1, 1], [], []>} : vector<16x128xbf16>, vector<128x128xbf16>, vector<16x128xf32> -> vector<16x128xf32>
    %43 = arith.addf %40, %42 : vector<16x128xf32>
    %44 = math.tanh %43 : vector<16x128xf32>
    %c5_i32 = arith.constant 5 : i32
    %45 = arith.index_cast %c5_i32 : i32 to index
    %c0_19 = arith.constant 0 : index
    %c0_20 = arith.constant 0 : index
    %46 = vector.load %arg2[%45, %c0_19, %c0_20] : memref<8x16x128xbf16, #tpu.memory_space<vmem>>, vector<1x16x128xbf16>
    %47 = vector.shape_cast %46 : vector<1x16x128xbf16> to vector<16x128xbf16>
    %48 = arith.extf %47 : vector<16x128xbf16> to vector<16x128xf32>
    %49 = arith.truncf %44 : vector<16x128xf32> to vector<16x128xbf16>
    %cst_21 = arith.constant dense<0.000000e+00> : vector<16x128xf32>
    %50 = tpu.matmul %49, %3, %cst_21 {dimension_numbers = #tpu.dot_dimension_numbers<[1], [0], [0], [1], [0, 0, 1, 1], [], []>} : vector<16x128xbf16>, vector<128x128xbf16>, vector<16x128xf32> -> vector<16x128xf32>
    %51 = arith.addf %48, %50 : vector<16x128xf32>
    %52 = math.tanh %51 : vector<16x128xf32>
    %c6_i32 = arith.constant 6 : i32
    %53 = arith.index_cast %c6_i32 : i32 to index
    %c0_22 = arith.constant 0 : index
    %c0_23 = arith.constant 0 : index
    %54 = vector.load %arg2[%53, %c0_22, %c0_23] : memref<8x16x128xbf16, #tpu.memory_space<vmem>>, vector<1x16x128xbf16>
    %55 = vector.shape_cast %54 : vector<1x16x128xbf16> to vector<16x128xbf16>
    %56 = arith.extf %55 : vector<16x128xbf16> to vector<16x128xf32>
    %57 = arith.truncf %52 : vector<16x128xf32> to vector<16x128xbf16>
    %cst_24 = arith.constant dense<0.000000e+00> : vector<16x128xf32>
    %58 = tpu.matmul %57, %3, %cst_24 {dimension_numbers = #tpu.dot_dimension_numbers<[1], [0], [0], [1], [0, 0, 1, 1], [], []>} : vector<16x128xbf16>, vector<128x128xbf16>, vector<16x128xf32> -> vector<16x128xf32>
    %59 = arith.addf %56, %58 : vector<16x128xf32>
    %60 = math.tanh %59 : vector<16x128xf32>
    %c7_i32 = arith.constant 7 : i32
    %61 = arith.index_cast %c7_i32 : i32 to index
    %c0_25 = arith.constant 0 : index
    %c0_26 = arith.constant 0 : index
    %62 = vector.load %arg2[%61, %c0_25, %c0_26] : memref<8x16x128xbf16, #tpu.memory_space<vmem>>, vector<1x16x128xbf16>
    %63 = vector.shape_cast %62 : vector<1x16x128xbf16> to vector<16x128xbf16>
    %64 = arith.extf %63 : vector<16x128xbf16> to vector<16x128xf32>
    %65 = arith.truncf %60 : vector<16x128xf32> to vector<16x128xbf16>
    %cst_27 = arith.constant dense<0.000000e+00> : vector<16x128xf32>
    %66 = tpu.matmul %65, %3, %cst_27 {dimension_numbers = #tpu.dot_dimension_numbers<[1], [0], [0], [1], [0, 0, 1, 1], [], []>} : vector<16x128xbf16>, vector<128x128xbf16>, vector<16x128xf32> -> vector<16x128xf32>
    %67 = arith.addf %64, %66 : vector<16x128xf32>
    %68 = math.tanh %67 : vector<16x128xf32>
    %c8_i32 = arith.constant 8 : i32
    %c0_28 = arith.constant 0 : index
    %c0_29 = arith.constant 0 : index
    %69 = vector.load %arg4[%c0_28, %c0_29] : memref<16x128xf32, #tpu.memory_space<vmem>>, vector<16x128xf32>
    tpu.vector_store %arg4[%c0_28, %c0_29], %68 {strides = array<i32>} : memref<16x128xf32, #tpu.memory_space<vmem>>, vector<16x128xf32>,
    return
  }
  func.func @transform_0(%arg0: i32, %arg1: i32) -> (i32, i32, i32) {
    %c0_i32 = arith.constant 0 : i32
    %c0_i32_0 = arith.constant 0 : i32
    return %arg1, %arg0, %c0_i32 : i32, i32, i32
  }
  func.func @transform_1(%arg0: i32, %arg1: i32) -> (i32, i32) {
    %c0_i32 = arith.constant 0 : i32
    %c0_i32_0 = arith.constant 0 : i32
    %c0_i32_1 = arith.constant 0 : i32
    return %c0_i32, %c0_i32_0 : i32, i32
  }
  func.func @transform_2(%arg0: i32, %arg1: i32) -> (i32, i32) {
    %c0_i32 = arith.constant 0 : i32
    %c0_i32_0 = arith.constant 0 : i32
    return %arg0, %c0_i32 : i32, i32
  }
}

</mosaic_0001>

<llo_original>
// kernel: tpu_custom_call.1
$region0: #{tpu_custom_call.1}
  #allocation0 [shape = 'u32[]', space=smem, size = 0x4, offset = 0x4, fixed_abs, tag = 'smem constant byte address 0x4 - core index']
  #allocation1 [shape = 'u32[144,128]{1,0:T(1,128)}', space=vmem, size = 0x12000, scoped, tag = 'internal scratch']
  %s0 = inlined_call_operand.hbm [shape: bf16[8,16,128], index: 0, kind: input, shape index: {}]
  %s1 = inlined_call_operand.hbm [shape: bf16[128,128], index: 1, kind: input, shape index: {}]
  %s2 = inlined_call_operand.hbm [shape: f32[16,128], index: 2, kind: output, shape index: {}]
  %s3 = sld [smem:[#allocation0]]
  $region30: #{tpu_custom_call.1} parent=0
    _
  %s5 = ssub.s32 1, %s3
  %s6 = scalar_select 0, %s5, %s3
  $region1: #{tpu_custom_call.1} parent=0
    #allocation2 [shape = 'u8[32768]{0}', space=vmem, size = 0x8000, scoped, tag = 'input window, operand 0, single buffered']
    #allocation3 [shape = 's32[1]{0}', space=sflag, size = 0x4, scoped, tag = 'scoped memory for tpu_custom_call.1']
    #allocation4 [shape = 's32[1]{0}', space=sflag, size = 0x4, scoped, tag = 'scoped memory for tpu_custom_call.1']
    #allocation5 [shape = 'u8[32768]{0}', space=vmem, size = 0x8000, scoped, tag = 'input window, operand 1, single buffered']
    #allocation6 [shape = 's32[1]{0}', space=sflag, size = 0x4, scoped, tag = 'scoped memory for tpu_custom_call.1']
    #allocation7 [shape = 'u8[8192]{0}', space=vmem, size = 0x2000, scoped, tag = 'output window, operand 0, single buffered']
    %7 = vsyncpa [#allocation3], 0
    %8 = vsyncpa [#allocation6], 0
    %9 = vsyncpa [#allocation4], 0
    // Predicated region
    $region2: #{tpu_custom_call.1} parent=1 // pred_check
      _
    $region3: #{tpu_custom_call.1} parent=1 // pred_check_branch
      %11 = sbr.rel (0) target = $region5
    $region4: #{tpu_custom_call.1} parent=1 // pred_region
      %s13 = ssub.s32 1024, 1024
      %14 = vsyncadd [#allocation3], %s13
      %s15 = sshll.u32 [#allocation2], 4
      %s16 = int_to_ptr.vmem [resolvable:$true] %s15
      %21 = dma.hbm_to_vmem [thread:$0]  %s0, 1024, %s16, [#allocation3], 64, 64, 4
    $region5: #{tpu_custom_call.1} parent=1 // pred_fallthru
      _
    // Predicated region
    $region6: #{tpu_custom_call.1} parent=1 // pred_check
      _
    $region7: #{tpu_custom_call.1} parent=1 // pred_check_branch
      %23 = sbr.rel (0) target = $region9
    $region8: #{tpu_custom_call.1} parent=1 // pred_region
      %s25 = ssub.s32 1024, 1024
      %26 = vsyncadd [#allocation6], %s25
      %s27 = sshll.u32 [#allocation5], 4
      %s28 = int_to_ptr.vmem [resolvable:$true] %s27
      %33 = dma.hbm_to_vmem [thread:$0]  %s1, 1024, %s28, [#allocation6], 64, 64, 4
    $region9: #{tpu_custom_call.1} parent=1 // pred_fallthru
      _
    // Predicated region
    $region10: #{tpu_custom_call.1} parent=1 // pred_check
      _
    $region11: #{tpu_custom_call.1} parent=1 // pred_check_branch
      %35 = sbr.rel (0) target = $region13
    $region12: #{tpu_custom_call.1} parent=1 // pred_region
      %36 = dma.done [#allocation3], 1024
    $region13: #{tpu_custom_call.1} parent=1 // pred_fallthru
      _
    // Predicated region
    $region14: #{tpu_custom_call.1} parent=1 // pred_check
      _
    $region15: #{tpu_custom_call.1} parent=1 // pred_check_branch
      %38 = sbr.rel (0) target = $region17
    $region16: #{tpu_custom_call.1} parent=1 // pred_region
      %39 = dma.done [#allocation6], 1024
    $region17: #{tpu_custom_call.1} parent=1 // pred_fallthru
      _
    %p41 = scmp.eq.s32.totalorder 0, 0
    // Predicated region
    $region18: #{tpu_custom_call.1} parent=1 // pred_check
      %p42 = pneg %p41
    $region19: #{tpu_custom_call.1} parent=1 // pred_check_branch
      %44 = sbr.rel (%p42) target = $region21
    $region20: #{tpu_custom_call.1} parent=1 // pred_region
      %45 = vst [vmem:[#allocation7] sm:$0xff] 0.0
      %46 = vst [vmem:[#allocation7 + $0x8] sm:$0xff] 0.0
    $region21: #{tpu_custom_call.1} parent=1 // pred_fallthru
      _
    %v47 = vld [vmem:[#allocation5] sm:$0xf]
    %v48 = vld [vmem:[#allocation5 + $0x4] sm:$0xf]
    %v49 = vld [vmem:[#allocation5 + $0x8] sm:$0xf]
    %v50 = vld [vmem:[#allocation5 + $0xc] sm:$0xf]
    %v51 = vld [vmem:[#allocation5 + $0x10] sm:$0xf]
    %v52 = vld [vmem:[#allocation5 + $0x14] sm:$0xf]
    %v53 = vld [vmem:[#allocation5 + $0x18] sm:$0xf]
    %v54 = vld [vmem:[#allocation5 + $0x1c] sm:$0xf]
    %v55 = vld [vmem:[#allocation5 + $0x20] sm:$0xf]
    %v56 = vld [vmem:[#allocation5 + $0x24] sm:$0xf]
    %v57 = vld [vmem:[#allocation5 + $0x28] sm:$0xf]
    %v58 = vld [vmem:[#allocation5 + $0x2c] sm:$0xf]
    %v59 = vld [vmem:[#allocation5 + $0x30] sm:$0xf]
    %v60 = vld [vmem:[#allocation5 + $0x34] sm:$0xf]
    %v61 = vld [vmem:[#allocation5 + $0x38] sm:$0xf]
    %v62 = vld [vmem:[#allocation5 + $0x3c] sm:$0xf]
    %v63 = vld [vmem:[#allocation7] sm:$0xff]
    %v64 = vld [vmem:[#allocation7 + $0x8] sm:$0xff]
    %v65 = vld [vmem:[#allocation2] sm:$0xf]
    %v66 = vld [vmem:[#allocation2 + $0x4] sm:$0xf]
    %v67 = vunpack.c.l.bf16 %v65
    %v68 = vunpack.c.l.bf16 %v66
    %v69 = vpack.c.bf16 %v64, %v63
    %v86 = vunpack.c.l.b16 %v47
    %v87 = vunpack.c.l.b16 %v48
    %v88 = vunpack.c.l.b16 %v49
    %v89 = vunpack.c.l.b16 %v50
    %v90 = vunpack.c.l.b16 %v51
    %v91 = vunpack.c.l.b16 %v52
    %v92 = vunpack.c.l.b16 %v53
    %v93 = vunpack.c.l.b16 %v54
    %v94 = vunpack.c.l.b16 %v55
    %v95 = vunpack.c.l.b16 %v56
    %v96 = vunpack.c.l.b16 %v57
    %v97 = vunpack.c.l.b16 %v58
    %v98 = vunpack.c.l.b16 %v59
    %v99 = vunpack.c.l.b16 %v60
    %v100 = vunpack.c.l.b16 %v61
    %v101 = vunpack.c.l.b16 %v62
    %v102 = vpack.c.b16 %v87, %v86
    %v103 = vpack.c.b16 %v89, %v88
    %v104 = vpack.c.b16 %v91, %v90
    %v105 = vpack.c.b16 %v93, %v92
    %v106 = vpack.c.b16 %v95, %v94
    %v107 = vpack.c.b16 %v97, %v96
    %v108 = vpack.c.b16 %v99, %v98
    %v109 = vpack.c.b16 %v101, %v100
    %118 = vmatprep.subr.bf16.mxu0 0
    %119 = vmatpush1.bf16.msra.mxu0 %v102
    %120 = vmatprep.subr.bf16.mxu0 0
    %121 = vmatpush1.bf16.msra.mxu0 %v103
    %122 = vmatprep.subr.bf16.mxu0 0
    %123 = vmatpush1.bf16.msra.mxu0 %v104
    %124 = vmatprep.subr.bf16.mxu0 0
    %125 = vmatpush1.bf16.msra.mxu0 %v105
    %126 = vmatprep.subr.bf16.mxu0 0
    %127 = vmatpush1.bf16.msra.mxu0 %v106
    %128 = vmatprep.subr.bf16.mxu0 0
    %129 = vmatpush1.bf16.msra.mxu0 %v107
    %130 = vmatprep.subr.bf16.mxu0 0
    %131 = vmatpush1.bf16.msra.mxu0 %v108
    %132 = vmatprep.subr.bf16.mxu0 0
    %133 = vmatpush1.bf16.msra.mxu0 %v109
    %134 = vmatprep.subr.bf16.mxu0 0
    %135 = vmatpush1.bf16.msra.mxu0 0
    %136 = vmatprep.subr.bf16.mxu0 0
    %137 = vmatpush1.bf16.msra.mxu0 0
    %138 = vmatprep.subr.bf16.mxu0 0
    %139 = vmatpush1.bf16.msra.mxu0 0
    %140 = vmatprep.subr.bf16.mxu0 0
    %141 = vmatpush1.bf16.msra.mxu0 0
    %142 = vmatprep.subr.bf16.mxu0 0
    %143 = vmatpush1.bf16.msra.mxu0 0
    %144 = vmatprep.subr.bf16.mxu0 0
    %145 = vmatpush1.bf16.msra.mxu0 0
    %146 = vmatprep.subr.bf16.mxu0 0
    %147 = vmatpush1.bf16.msra.mxu0 0
    %148 = vmatprep.subr.bf16.mxu0 0
    %149 = vmatpush1.bf16.msra.mxu0 0
    %150 = vmatprep.mubr.bf16.mxu0 0
    %151 = vmatmul.mubr.bf16.gmra.mrb[0].mxu0 %v69
    %v152 = vpop.f32.mrb[0].mxu0
    %v153 = vadd.f32 0.0, %v152
    %v154 = vpop.f32.mrb[0].mxu0
    %v155 = vpop.f32.mrb[0].mxu0
    %v156 = vadd.f32 0.0, %v155
    %v157 = vpop.f32.mrb[0].mxu0
    %158 = vdwg.mxu0
    %v159 = vadd.f32 %v67, %v153
    %v160 = vadd.f32 %v68, %v156
    %v161 = vtanh.pop %v159
    %v162 = vtanh.pop %v160
    %s163 = scalar_lea.vmem [#allocation2], 8
    %v164 = vld [vmem:[%s163] sm:$0xf]
    %v165 = vld [vmem:[%s163 + $0x4] sm:$0xf]
    %v166 = vunpack.c.l.bf16 %v164
    %v167 = vunpack.c.l.bf16 %v165
    %v168 = vpack.c.bf16 %v162, %v161
    %169 = vmatprep.subr.bf16.mxu0 0
    %170 = vmatpush1.bf16.msra.mxu0 %v102
    %171 = vmatprep.subr.bf16.mxu0 0
    %172 = vmatpush1.bf16.msra.mxu0 %v103
    %173 = vmatprep.subr.bf16.mxu0 0
    %174 = vmatpush1.bf16.msra.mxu0 %v104
    %175 = vmatprep.subr.bf16.mxu0 0
    %176 = vmatpush1.bf16.msra.mxu0 %v105
    %177 = vmatprep.subr.bf16.mxu0 0
    %178 = vmatpush1.bf16.msra.mxu0 %v106
    %179 = vmatprep.subr.bf16.mxu0 0
    %180 = vmatpush1.bf16.msra.mxu0 %v107
    %181 = vmatprep.subr.bf16.mxu0 0
    %182 = vmatpush1.bf16.msra.mxu0 %v108
    %183 = vmatprep.subr.bf16.mxu0 0
    %184 = vmatpush1.bf16.msra.mxu0 %v109
    %185 = vmatprep.subr.bf16.mxu0 0
    %186 = vmatpush1.bf16.msra.mxu0 0
    %187 = vmatprep.subr.bf16.mxu0 0
    %188 = vmatpush1.bf16.msra.mxu0 0
    %189 = vmatprep.subr.bf16.mxu0 0
    %190 = vmatpush1.bf16.msra.mxu0 0
    %191 = vmatprep.subr.bf16.mxu0 0
    %192 = vmatpush1.bf16.msra.mxu0 0
    %193 = vmatprep.subr.bf16.mxu0 0
    %194 = vmatpush1.bf16.msra.mxu0 0
    %195 = vmatprep.subr.bf16.mxu0 0
    %196 = vmatpush1.bf16.msra.mxu0 0
    %197 = vmatprep.subr.bf16.mxu0 0
    %198 = vmatpush1.bf16.msra.mxu0 0
    %199 = vmatprep.subr.bf16.mxu0 0
    %200 = vmatpush1.bf16.msra.mxu0 0
    %201 = vmatprep.mubr.bf16.mxu0 0
    %202 = vmatmul.mubr.bf16.gmra.mrb[0].mxu0 %v168
    %v203 = vpop.f32.mrb[0].mxu0
    %v204 = vadd.f32 0.0, %v203
    %v205 = vpop.f32.mrb[0].mxu0
    %v206 = vpop.f32.mrb[0].mxu0
    %v207 = vadd.f32 0.0, %v206
    %v208 = vpop.f32.mrb[0].mxu0
    %209 = vdwg.mxu0
    %v210 = vadd.f32 %v166, %v204
    %v211 = vadd.f32 %v167, %v207
    %v212 = vtanh.pop %v210
    %v213 = vtanh.pop %v211
    %s214 = scalar_lea.vmem [#allocation2], 16
    %v215 = vld [vmem:[%s214] sm:$0xf]
    %v216 = vld [vmem:[%s214 + $0x4] sm:$0xf]
    %v217 = vunpack.c.l.bf16 %v215
    %v218 = vunpack.c.l.bf16 %v216
    %v219 = vpack.c.bf16 %v213, %v212
    %220 = vmatprep.subr.bf16.mxu0 0
    %221 = vmatpush1.bf16.msra.mxu0 %v102
    %222 = vmatprep.subr.bf16.mxu0 0
    %223 = vmatpush1.bf16.msra.mxu0 %v103
    %224 = vmatprep.subr.bf16.mxu0 0
    %225 = vmatpush1.bf16.msra.mxu0 %v104
    %226 = vmatprep.subr.bf16.mxu0 0
    %227 = vmatpush1.bf16.msra.mxu0 %v105
    %228 = vmatprep.subr.bf16.mxu0 0
    %229 = vmatpush1.bf16.msra.mxu0 %v106
    %230 = vmatprep.subr.bf16.mxu0 0
    %231 = vmatpush1.bf16.msra.mxu0 %v107
    %232 = vmatprep.subr.bf16.mxu0 0
    %233 = vmatpush1.bf16.msra.mxu0 %v108
    %234 = vmatprep.subr.bf16.mxu0 0
    %235 = vmatpush1.bf16.msra.mxu0 %v109
    %236 = vmatprep.subr.bf16.mxu0 0
    %237 = vmatpush1.bf16.msra.mxu0 0
    %238 = vmatprep.subr.bf16.mxu0 0
    %239 = vmatpush1.bf16.msra.mxu0 0
    %240 = vmatprep.subr.bf16.mxu0 0
    %241 = vmatpush1.bf16.msra.mxu0 0
    %242 = vmatprep.subr.bf16.mxu0 0
    %243 = vmatpush1.bf16.msra.mxu0 0
    %244 = vmatprep.subr.bf16.mxu0 0
    %245 = vmatpush1.bf16.msra.mxu0 0
    %246 = vmatprep.subr.bf16.mxu0 0
    %247 = vmatpush1.bf16.msra.mxu0 0
    %248 = vmatprep.subr.bf16.mxu0 0
    %249 = vmatpush1.bf16.msra.mxu0 0
    %250 = vmatprep.subr.bf16.mxu0 0
    %251 = vmatpush1.bf16.msra.mxu0 0
    %252 = vmatprep.mubr.bf16.mxu0 0
    %253 = vmatmul.mubr.bf16.gmra.mrb[0].mxu0 %v219
    %v254 = vpop.f32.mrb[0].mxu0
    %v255 = vadd.f32 0.0, %v254
    %v256 = vpop.f32.mrb[0].mxu0
    %v257 = vpop.f32.mrb[0].mxu0
    %v258 = vadd.f32 0.0, %v257
    %v259 = vpop.f32.mrb[0].mxu0
    %260 = vdwg.mxu0
    %v261 = vadd.f32 %v217, %v255
    %v262 = vadd.f32 %v218, %v258
    %v263 = vtanh.pop %v261
    %v264 = vtanh.pop %v262
    %s265 = scalar_lea.vmem [#allocation2], 24
    %v266 = vld [vmem:[%s265] sm:$0xf]
    %v267 = vld [vmem:[%s265 + $0x4] sm:$0xf]
    %v268 = vunpack.c.l.bf16 %v266
    %v269 = vunpack.c.l.bf16 %v267
    %v270 = vpack.c.bf16 %v264, %v263
    %271 = vmatprep.subr.bf16.mxu0 0
    %272 = vmatpush1.bf16.msra.mxu0 %v102
    %273 = vmatprep.subr.bf16.mxu0 0
    %274 = vmatpush1.bf16.msra.mxu0 %v103
    %275 = vmatprep.subr.bf16.mxu0 0
    %276 = vmatpush1.bf16.msra.mxu0 %v104
    %277 = vmatprep.subr.bf16.mxu0 0
    %278 = vmatpush1.bf16.msra.mxu0 %v105
    %279 = vmatprep.subr.bf16.mxu0 0
    %280 = vmatpush1.bf16.msra.mxu0 %v106
    %281 = vmatprep.subr.bf16.mxu0 0
    %282 = vmatpush1.bf16.msra.mxu0 %v107
    %283 = vmatprep.subr.bf16.mxu0 0
    %284 = vmatpush1.bf16.msra.mxu0 %v108
    %285 = vmatprep.subr.bf16.mxu0 0
    %286 = vmatpush1.bf16.msra.mxu0 %v109
    %287 = vmatprep.subr.bf16.mxu0 0
    %288 = vmatpush1.bf16.msra.mxu0 0
    %289 = vmatprep.subr.bf16.mxu0 0
    %290 = vmatpush1.bf16.msra.mxu0 0
    %291 = vmatprep.subr.bf16.mxu0 0
    %292 = vmatpush1.bf16.msra.mxu0 0
    %293 = vmatprep.subr.bf16.mxu0 0
    %294 = vmatpush1.bf16.msra.mxu0 0
    %295 = vmatprep.subr.bf16.mxu0 0
    %296 = vmatpush1.bf16.msra.mxu0 0
    %297 = vmatprep.subr.bf16.mxu0 0
    %298 = vmatpush1.bf16.msra.mxu0 0
    %299 = vmatprep.subr.bf16.mxu0 0
    %300 = vmatpush1.bf16.msra.mxu0 0
    %301 = vmatprep.subr.bf16.mxu0 0
    %302 = vmatpush1.bf16.msra.mxu0 0
    %303 = vmatprep.mubr.bf16.mxu0 0
    %304 = vmatmul.mubr.bf16.gmra.mrb[0].mxu0 %v270
    %v305 = vpop.f32.mrb[0].mxu0
    %v306 = vadd.f32 0.0, %v305
    %v307 = vpop.f32.mrb[0].mxu0
    %v308 = vpop.f32.mrb[0].mxu0
    %v309 = vadd.f32 0.0, %v308
    %v310 = vpop.f32.mrb[0].mxu0
    %311 = vdwg.mxu0
    %v312 = vadd.f32 %v268, %v306
    %v313 = vadd.f32 %v269, %v309
    %v314 = vtanh.pop %v312
    %v315 = vtanh.pop %v313
    %s316 = scalar_lea.vmem [#allocation2], 32
    %v317 = vld [vmem:[%s316] sm:$0xf]
    %v318 = vld [vmem:[%s316 + $0x4] sm:$0xf]
    %v319 = vunpack.c.l.bf16 %v317
    %v320 = vunpack.c.l.bf16 %v318
    %v321 = vpack.c.bf16 %v315, %v314
    %322 = vmatprep.subr.bf16.mxu0 0
    %323 = vmatpush1.bf16.msra.mxu0 %v102
    %324 = vmatprep.subr.bf16.mxu0 0
    %325 = vmatpush1.bf16.msra.mxu0 %v103
    %326 = vmatprep.subr.bf16.mxu0 0
    %327 = vmatpush1.bf16.msra.mxu0 %v104
    %328 = vmatprep.subr.bf16.mxu0 0
    %329 = vmatpush1.bf16.msra.mxu0 %v105
    %330 = vmatprep.subr.bf16.mxu0 0
    %331 = vmatpush1.bf16.msra.mxu0 %v106
    %332 = vmatprep.subr.bf16.mxu0 0
    %333 = vmatpush1.bf16.msra.mxu0 %v107
    %334 = vmatprep.subr.bf16.mxu0 0
    %335 = vmatpush1.bf16.msra.mxu0 %v108
    %336 = vmatprep.subr.bf16.mxu0 0
    %337 = vmatpush1.bf16.msra.mxu0 %v109
    %338 = vmatprep.subr.bf16.mxu0 0
    %339 = vmatpush1.bf16.msra.mxu0 0
    %340 = vmatprep.subr.bf16.mxu0 0
    %341 = vmatpush1.bf16.msra.mxu0 0
    %342 = vmatprep.subr.bf16.mxu0 0
    %343 = vmatpush1.bf16.msra.mxu0 0
    %344 = vmatprep.subr.bf16.mxu0 0
    %345 = vmatpush1.bf16.msra.mxu0 0
    %346 = vmatprep.subr.bf16.mxu0 0
    %347 = vmatpush1.bf16.msra.mxu0 0
    %348 = vmatprep.subr.bf16.mxu0 0
    %349 = vmatpush1.bf16.msra.mxu0 0
    %350 = vmatprep.subr.bf16.mxu0 0
    %351 = vmatpush1.bf16.msra.mxu0 0
    %352 = vmatprep.subr.bf16.mxu0 0
    %353 = vmatpush1.bf16.msra.mxu0 0
    %354 = vmatprep.mubr.bf16.mxu0 0
    %355 = vmatmul.mubr.bf16.gmra.mrb[0].mxu0 %v321
    %v356 = vpop.f32.mrb[0].mxu0
    %v357 = vadd.f32 0.0, %v356
    %v358 = vpop.f32.mrb[0].mxu0
    %v359 = vpop.f32.mrb[0].mxu0
    %v360 = vadd.f32 0.0, %v359
    %v361 = vpop.f32.mrb[0].mxu0
    %362 = vdwg.mxu0
    %v363 = vadd.f32 %v319, %v357
    %v364 = vadd.f32 %v320, %v360
    %v365 = vtanh.pop %v363
    %v366 = vtanh.pop %v364
    %s367 = scalar_lea.vmem [#allocation2], 40
    %v368 = vld [vmem:[%s367] sm:$0xf]
    %v369 = vld [vmem:[%s367 + $0x4] sm:$0xf]
    %v370 = vunpack.c.l.bf16 %v368
    %v371 = vunpack.c.l.bf16 %v369
    %v372 = vpack.c.bf16 %v366, %v365
    %373 = vmatprep.subr.bf16.mxu0 0
    %374 = vmatpush1.bf16.msra.mxu0 %v102
    %375 = vmatprep.subr.bf16.mxu0 0
    %376 = vmatpush1.bf16.msra.mxu0 %v103
    %377 = vmatprep.subr.bf16.mxu0 0
    %378 = vmatpush1.bf16.msra.mxu0 %v104
    %379 = vmatprep.subr.bf16.mxu0 0
    %380 = vmatpush1.bf16.msra.mxu0 %v105
    %381 = vmatprep.subr.bf16.mxu0 0
    %382 = vmatpush1.bf16.msra.mxu0 %v106
    %383 = vmatprep.subr.bf16.mxu0 0
    %384 = vmatpush1.bf16.msra.mxu0 %v107
    %385 = vmatprep.subr.bf16.mxu0 0
    %386 = vmatpush1.bf16.msra.mxu0 %v108
    %387 = vmatprep.subr.bf16.mxu0 0
    %388 = vmatpush1.bf16.msra.mxu0 %v109
    %389 = vmatprep.subr.bf16.mxu0 0
    %390 = vmatpush1.bf16.msra.mxu0 0
    %391 = vmatprep.subr.bf16.mxu0 0
    %392 = vmatpush1.bf16.msra.mxu0 0
    %393 = vmatprep.subr.bf16.mxu0 0
    %394 = vmatpush1.bf16.msra.mxu0 0
    %395 = vmatprep.subr.bf16.mxu0 0
    %396 = vmatpush1.bf16.msra.mxu0 0
    %397 = vmatprep.subr.bf16.mxu0 0
    %398 = vmatpush1.bf16.msra.mxu0 0
    %399 = vmatprep.subr.bf16.mxu0 0
    %400 = vmatpush1.bf16.msra.mxu0 0
    %401 = vmatprep.subr.bf16.mxu0 0
    %402 = vmatpush1.bf16.msra.mxu0 0
    %403 = vmatprep.subr.bf16.mxu0 0
    %404 = vmatpush1.bf16.msra.mxu0 0
    %405 = vmatprep.mubr.bf16.mxu0 0
    %406 = vmatmul.mubr.bf16.gmra.mrb[0].mxu0 %v372
    %v407 = vpop.f32.mrb[0].mxu0
    %v408 = vadd.f32 0.0, %v407
    %v409 = vpop.f32.mrb[0].mxu0
    %v410 = vpop.f32.mrb[0].mxu0
    %v411 = vadd.f32 0.0, %v410
    %v412 = vpop.f32.mrb[0].mxu0
    %413 = vdwg.mxu0
    %v414 = vadd.f32 %v370, %v408
    %v415 = vadd.f32 %v371, %v411
    %v416 = vtanh.pop %v414
    %v417 = vtanh.pop %v415
    %s418 = scalar_lea.vmem [#allocation2], 48
    %v419 = vld [vmem:[%s418] sm:$0xf]
    %v420 = vld [vmem:[%s418 + $0x4] sm:$0xf]
    %v421 = vunpack.c.l.bf16 %v419
    %v422 = vunpack.c.l.bf16 %v420
    %v423 = vpack.c.bf16 %v417, %v416
    %424 = vmatprep.subr.bf16.mxu0 0
    %425 = vmatpush1.bf16.msra.mxu0 %v102
    %426 = vmatprep.subr.bf16.mxu0 0
    %427 = vmatpush1.bf16.msra.mxu0 %v103
    %428 = vmatprep.subr.bf16.mxu0 0
    %429 = vmatpush1.bf16.msra.mxu0 %v104
    %430 = vmatprep.subr.bf16.mxu0 0
    %431 = vmatpush1.bf16.msra.mxu0 %v105
    %432 = vmatprep.subr.bf16.mxu0 0
    %433 = vmatpush1.bf16.msra.mxu0 %v106
    %434 = vmatprep.subr.bf16.mxu0 0
    %435 = vmatpush1.bf16.msra.mxu0 %v107
    %436 = vmatprep.subr.bf16.mxu0 0
    %437 = vmatpush1.bf16.msra.mxu0 %v108
    %438 = vmatprep.subr.bf16.mxu0 0
    %439 = vmatpush1.bf16.msra.mxu0 %v109
    %440 = vmatprep.subr.bf16.mxu0 0
    %441 = vmatpush1.bf16.msra.mxu0 0
    %442 = vmatprep.subr.bf16.mxu0 0
    %443 = vmatpush1.bf16.msra.mxu0 0
    %444 = vmatprep.subr.bf16.mxu0 0
    %445 = vmatpush1.bf16.msra.mxu0 0
    %446 = vmatprep.subr.bf16.mxu0 0
    %447 = vmatpush1.bf16.msra.mxu0 0
    %448 = vmatprep.subr.bf16.mxu0 0
    %449 = vmatpush1.bf16.msra.mxu0 0
    %450 = vmatprep.subr.bf16.mxu0 0
    %451 = vmatpush1.bf16.msra.mxu0 0
    %452 = vmatprep.subr.bf16.mxu0 0
    %453 = vmatpush1.bf16.msra.mxu0 0
    %454 = vmatprep.subr.bf16.mxu0 0
    %455 = vmatpush1.bf16.msra.mxu0 0
    %456 = vmatprep.mubr.bf16.mxu0 0
    %457 = vmatmul.mubr.bf16.gmra.mrb[0].mxu0 %v423
    %v458 = vpop.f32.mrb[0].mxu0
    %v459 = vadd.f32 0.0, %v458
    %v460 = vpop.f32.mrb[0].mxu0
    %v461 = vpop.f32.mrb[0].mxu0
    %v462 = vadd.f32 0.0, %v461
    %v463 = vpop.f32.mrb[0].mxu0
    %464 = vdwg.mxu0
    %v465 = vadd.f32 %v421, %v459
    %v466 = vadd.f32 %v422, %v462
    %v467 = vtanh.pop %v465
    %v468 = vtanh.pop %v466
    %s469 = scalar_lea.vmem [#allocation2], 56
    %v470 = vld [vmem:[%s469] sm:$0xf]
    %v471 = vld [vmem:[%s469 + $0x4] sm:$0xf]
    %v472 = vunpack.c.l.bf16 %v470
    %v473 = vunpack.c.l.bf16 %v471
    %v474 = vpack.c.bf16 %v468, %v467
    %475 = vmatprep.subr.bf16.mxu0 0
    %476 = vmatpush1.bf16.msra.mxu0 %v102
    %477 = vmatprep.subr.bf16.mxu0 0
    %478 = vmatpush1.bf16.msra.mxu0 %v103
    %479 = vmatprep.subr.bf16.mxu0 0
    %480 = vmatpush1.bf16.msra.mxu0 %v104
    %481 = vmatprep.subr.bf16.mxu0 0
    %482 = vmatpush1.bf16.msra.mxu0 %v105
    %483 = vmatprep.subr.bf16.mxu0 0
    %484 = vmatpush1.bf16.msra.mxu0 %v106
    %485 = vmatprep.subr.bf16.mxu0 0
    %486 = vmatpush1.bf16.msra.mxu0 %v107
    %487 = vmatprep.subr.bf16.mxu0 0
    %488 = vmatpush1.bf16.msra.mxu0 %v108
    %489 = vmatprep.subr.bf16.mxu0 0
    %490 = vmatpush1.bf16.msra.mxu0 %v109
    %491 = vmatprep.subr.bf16.mxu0 0
    %492 = vmatpush1.bf16.msra.mxu0 0
    %493 = vmatprep.subr.bf16.mxu0 0
    %494 = vmatpush1.bf16.msra.mxu0 0
    %495 = vmatprep.subr.bf16.mxu0 0
    %496 = vmatpush1.bf16.msra.mxu0 0
    %497 = vmatprep.subr.bf16.mxu0 0
    %498 = vmatpush1.bf16.msra.mxu0 0
    %499 = vmatprep.subr.bf16.mxu0 0
    %500 = vmatpush1.bf16.msra.mxu0 0
    %501 = vmatprep.subr.bf16.mxu0 0
    %502 = vmatpush1.bf16.msra.mxu0 0
    %503 = vmatprep.subr.bf16.mxu0 0
    %504 = vmatpush1.bf16.msra.mxu0 0
    %505 = vmatprep.subr.bf16.mxu0 0
    %506 = vmatpush1.bf16.msra.mxu0 0
    %507 = vmatprep.mubr.bf16.mxu0 0
    %508 = vmatmul.mubr.bf16.gmra.mrb[0].mxu0 %v474
    %v509 = vpop.f32.mrb[0].mxu0
    %v510 = vadd.f32 0.0, %v509
    %v511 = vpop.f32.mrb[0].mxu0
    %v512 = vpop.f32.mrb[0].mxu0
    %v513 = vadd.f32 0.0, %v512
    %v514 = vpop.f32.mrb[0].mxu0
    %515 = vdwg.mxu0
    %v516 = vadd.f32 %v472, %v510
    %v517 = vadd.f32 %v473, %v513
    %v518 = vtanh.pop %v516
    %v519 = vtanh.pop %v517
    %520 = vst [vmem:[#allocation7] sm:$0xff] %v518
    %521 = vst [vmem:[#allocation7 + $0x8] sm:$0xff] %v519
    // Predicated region
    $region22: #{tpu_custom_call.1} parent=1 // pred_check
      _
    $region23: #{tpu_custom_call.1} parent=1 // pred_check_branch
      %523 = sbr.rel (0) target = $region25
    $region24: #{tpu_custom_call.1} parent=1 // pred_region
      %s525 = ssub.s32 256, 256
      %526 = vsyncadd [#allocation4], %s525
      %s527 = sshll.u32 [#allocation7], 4
      %s528 = int_to_ptr.vmem [resolvable:$true] %s527
      %533 = dma.vmem_to_hbm [thread:$0]  %s528, 256, %s2, [#allocation4], 128, 128, 8
    $region25: #{tpu_custom_call.1} parent=1 // pred_fallthru
      _
    // Predicated region
    $region26: #{tpu_custom_call.1} parent=1 // pred_check
      _
    $region27: #{tpu_custom_call.1} parent=1 // pred_check_branch
      %535 = sbr.rel (0) target = $region29
    $region28: #{tpu_custom_call.1} parent=1 // pred_region
      %536 = dma.done [#allocation4], 256
    $region29: #{tpu_custom_call.1} parent=1 // pred_fallthru
      _
    %537 = vsyncpa [#allocation3], 1
    %538 = vsyncpa [#allocation6], 1
    %539 = vsyncpa [#allocation4], 1

</llo_original>
